<compile_context>
chip_gen: v5e
topology: v5e:2x2
jax: 0.10.0
libtpu: 0.0.40
codegen_flags: <defaults>
</compile_context>

<pallas_src>
import jax
import jax.numpy as jnp
from jax.experimental import pallas as pl
from jax.experimental.pallas import tpu as pltpu


# --------------------------------------------------------------------------- #
# Tiling / VMEM planning
# --------------------------------------------------------------------------- #
def _round_up(x, m):
    return ((x + m - 1) // m) * m


def _vmem_plan():
    """(budget for the double-buffered hidden tile, scoped-VMEM limit).

    v5e/v6e have 128 MiB physical VMEM; v7x only 64 MiB -> smaller tiles and a
    limit that stays well under the physical capacity.
    """
    mib = 1024 * 1024
    try:
        cap = pltpu.get_tpu_info().vmem_capacity_bytes
    except Exception:
        cap = 64 * mib  # conservative fallback (treat as v7x-sized)
    if cap >= 128 * mib:            # v5e / v6e
        return 48 * mib, 80 * mib
    return 20 * mib, 40 * mib       # v7x (or unknown)


def _choose_s_tile(batch, seq, hidden, itemsize, h_budget_bytes):
    """Largest multiple-of-8 sequence tile whose double-buffered
    [B, tile, H] copy fits `h_budget_bytes` (capped at 1024 rows)."""
    bytes_per_seq_row = max(1, batch * hidden * itemsize)
    max_rows = h_budget_bytes // (2 * bytes_per_seq_row)   # 2 = double buffer
    tile = max(8, (max_rows // 8) * 8)
    tile = min(tile, 1024)
    return min(tile, _round_up(seq, 8))


# --------------------------------------------------------------------------- #
# Kernel
# --------------------------------------------------------------------------- #
def _make_critic_kernel(s_actual, s_tile, batch):
    needs_mask = (s_actual % s_tile) != 0   # padded sequence rows must be masked

    def kernel(h_ref, wa_ref, w1_ref, b1_ref, w2_ref, b2_ref, w3_ref, b3_ref,
               out_ref, m_sc, l_sc, acc_sc):
        k = pl.program_id(0)

        @pl.when(k == 0)
        def _init():
            m_sc[...] = jnp.full_like(m_sc, -jnp.inf)
            l_sc[...] = jnp.zeros_like(l_sc)
            acc_sc[...] = jnp.zeros_like(acc_sc)

        h = h_ref[...]                               # [B, s_tile, H] native dtype (bf16 OK)
        wa = wa_ref[...].astype(h.dtype)             # [H, 1]

        if needs_mask:
            pos = k * s_tile + jax.lax.broadcasted_iota(jnp.int32, (s_tile, 1), 0)
            valid = pos < s_actual                   # [s_tile, 1]

        # Static unroll over batch rows.  On the production path B == 1 (only
        # last_hidden[:1] feeds the returned scalar), so this is a single body.
        # All heavy math is rank-2 MXU dots with f32 accumulation.
        for b in range(batch):
            hb = h[b]                                                # [s_tile, H]

            # attn_proj scores on the MXU: [s_tile, H] @ [H, 1]
            s_col = jnp.dot(hb, wa, preferred_element_type=jnp.float32)
            if needs_mask:
                s_col = jnp.where(valid, s_col, -jnp.inf)

            # online softmax (running max / denom / weighted-sum rescale)
            m_prev = m_sc[b:b + 1, :]                                # [1, 1]
            m_new = jnp.maximum(m_prev, jnp.max(s_col, axis=0, keepdims=True))
            alpha = jnp.exp(m_prev - m_new)                          # [1, 1]
            p_col = jnp.exp(s_col - m_new)                           # [s_tile, 1]
            l_sc[b:b + 1, :] = (alpha * l_sc[b:b + 1, :]
                                + jnp.sum(p_col, axis=0, keepdims=True))

            # pooling contribution on the MXU: p^T @ h -> [1, H]
            contrib = jax.lax.dot_general(
                p_col.astype(h.dtype), hb,
                dimension_numbers=(((0,), (0,)), ((), ())),
                preferred_element_type=jnp.float32)
            acc_sc[b:b + 1, :] = alpha * acc_sc[b:b + 1, :] + contrib
            m_sc[b:b + 1, :] = m_new

        # Tiny [B, 64] MLP head runs once, on the last sequence tile only.
        @pl.when(k == pl.num_programs(0) - 1)
        def _finalize():
            pooled = acc_sc[...] * pl.reciprocal(l_sc[...], approx=True)   # [B, H]
            x = jnp.dot(pooled, w1_ref[...], preferred_element_type=jnp.float32)
            x = jnp.maximum(x + b1_ref[...], 0.0)
            x = jnp.dot(x, w2_ref[...], preferred_element_type=jnp.float32)
            x = jnp.maximum(x + b2_ref[...], 0.0)
            v = jnp.dot(x, w3_ref[...], preferred_element_type=jnp.float32) + b3_ref[...]
            out_ref[...] = v.astype(out_ref.dtype)

    return kernel


# --------------------------------------------------------------------------- #
# Wrappers
# --------------------------------------------------------------------------- #
def critic_values(last_hidden, params, *, s_tile=None):
    """Attention-pooled value head via Pallas; returns one value per batch row."""
    B, S, H = last_hidden.shape
    wa, w1, b1, w2, b2, w3, b3 = params
    wa_col = wa.reshape(H, 1)    # attn_proj weight [1, H] -> column [H, 1]

    h_budget, vmem_limit = _vmem_plan()
    itemsize = jnp.dtype(last_hidden.dtype).itemsize
    if s_tile is None:
        s_tile = _choose_s_tile(B, S, H, itemsize, h_budget)
    s_tile = max(8, _round_up(int(s_tile), 8))
    s_pad = _round_up(S, s_tile)
    if s_pad != S:
        last_hidden = jnp.pad(last_hidden, ((0, 0), (0, s_pad - S), (0, 0)))
    num_k = s_pad // s_tile

    kernel = _make_critic_kernel(S, s_tile, B)

    out = pl.pallas_call(
        kernel,
        out_shape=jax.ShapeDtypeStruct((B, 1), jnp.float32),
        grid_spec=pltpu.PrefetchScalarGridSpec(
            num_scalar_prefetch=0,
            grid=(num_k,),                                    # streamed S tiles
            in_specs=[
                pl.BlockSpec((B, s_tile, H), lambda k: (0, k, 0)),  # last_hidden
                pl.BlockSpec((H, 1), lambda k: (0, 0)),             # attn_proj w
                pl.BlockSpec((H, 64), lambda k: (0, 0)),            # w1
                pl.BlockSpec((1, 64), lambda k: (0, 0)),            # b1
                pl.BlockSpec((64, 64), lambda k: (0, 0)),           # w2
                pl.BlockSpec((1, 64), lambda k: (0, 0)),            # b2
                pl.BlockSpec((64, 1), lambda k: (0, 0)),            # w3
                pl.BlockSpec((1, 1), lambda k: (0, 0)),             # b3
            ],
            out_specs=pl.BlockSpec((B, 1), lambda k: (0, 0)),
            scratch_shapes=[
                pltpu.VMEM((B, 1), jnp.float32),   # running max
                pltpu.VMEM((B, 1), jnp.float32),   # running denom
                pltpu.VMEM((B, H), jnp.float32),   # running weighted sum
            ],
        ),
        compiler_params=pltpu.CompilerParams(
            dimension_semantics=("arbitrary",),    # sequence axis is a reduction
            vmem_limit_bytes=vmem_limit,
        ),
    )(last_hidden, wa_col, w1, b1, w2, b2, w3, b3)
    return out[:, 0]


def critic_forward(last_hidden, params):
    """Matches CriticNetwork.forward: the module returns x.flatten()[0], i.e.
    only batch row 0, so only that row is streamed through the kernel."""
    return critic_values(last_hidden[:1], params)[0]


# --------------------------------------------------------------------------- #
# Params / reference
# --------------------------------------------------------------------------- #
def init_params(key, hidden_size, input_dim):
    """Deterministic synthetic parameters (shapes match the nn.Module)."""
    ks = jax.random.split(key, 7)
    s = 0.05
    wa = s * jax.random.normal(ks[0], (1, hidden_size), jnp.float32)   # attn_proj [1, H]
    w1 = s * jax.random.normal(ks[1], (input_dim, 64), jnp.float32)    # Linear(input_dim, 64)
    b1 = s * jax.random.normal(ks[2], (1, 64), jnp.float32)
    w2 = s * jax.random.normal(ks[3], (64, 64), jnp.float32)           # Linear(64, 64)
    b2 = s * jax.random.normal(ks[4], (1, 64), jnp.float32)
    w3 = s * jax.random.normal(ks[5], (64, 1), jnp.float32)            # Linear(64, 1)
    b3 = s * jax.random.normal(ks[6], (1, 1), jnp.float32)
    return (wa, w1, b1, w2, b2, w3, b3)


def reference_values(last_hidden, params):
    """Plain-JAX reference mirroring the PyTorch forward, one value per row."""
    wa, w1, b1, w2, b2, w3, b3 = params
    scores = jnp.einsum('bsh,oh->bso', last_hidden, wa)[..., 0]   # [B, S]
    weights = jax.nn.softmax(scores, axis=1)
    pooled = jnp.einsum('bsh,bs->bh', last_hidden, weights)
    x = jnp.maximum(pooled @ w1 + b1, 0.0)
    x = jnp.maximum(x @ w2 + b2, 0.0)
    x = x @ w3 + b3
    return x[:, 0]


def reference_forward(last_hidden, params):
    return reference_values(last_hidden, params)[0]


# --------------------------------------------------------------------------- #
if __name__ == "__main__":
    key = jax.random.PRNGKey(0)
    k_h, k_p, k_h2 = jax.random.split(key, 3)

    # Small shapes: B=2 sequences, seq=8 tokens, hidden=32.
    # simple_nn input_dim == hidden_size (pooled is [B, H]; Flatten is identity).
    B, S, H = 2, 8, 32
    last_hidden = jax.random.normal(k_h, (B, S, H), jnp.float32)
    params = init_params(k_p, hidden_size=H, input_dim=H)

    # TODO(synk): the LLM (self.model) + tokenizer producing `last_hidden` are
    # outside this kernel; last_hidden is synthesized directly.

    # Module-equivalent scalar (= x.flatten()[0], batch row 0 only).
    val = jax.block_until_ready(critic_forward(last_hidden, params))
    ref = reference_forward(last_hidden, params)
    assert jnp.allclose(val, ref, atol=1e-3, rtol=1e-3), (val, ref)

    # Full-batch values through the same kernel.
    vals = jax.block_until_ready(critic_values(last_hidden, params))
    refs = reference_values(last_hidden, params)
    assert jnp.allclose(vals, refs, atol=1e-3, rtol=1e-3), (vals, refs)

    # Exercise the multi-tile online-softmax + padding-mask path
    # (S=20, forced tile=8 -> 3 sequence tiles, last one partially padded).
    lh2 = jax.random.normal(k_h2, (B, 20, H), jnp.float32)
    vals2 = jax.block_until_ready(critic_values(lh2, params, s_tile=8))
    refs2 = reference_values(lh2, params)
    assert jnp.allclose(vals2, refs2, atol=1e-3, rtol=1e-3), (vals2, refs2)

    print("KERNEL_OK")
</pallas_src>

<mosaic_0001>
module attributes {stable_mosaic.version = 11 : i64} {
  func.func @kernel(%arg0: i32, %arg1: memref<1x8x32xf32, #tpu.memory_space<vmem>>, %arg2: memref<32x1xf32, #tpu.memory_space<vmem>>, %arg3: memref<32x64xf32, #tpu.memory_space<vmem>>, %arg4: memref<1x64xf32, #tpu.memory_space<vmem>>, %arg5: memref<64x64xf32, #tpu.memory_space<vmem>>, %arg6: memref<1x64xf32, #tpu.memory_space<vmem>>, %arg7: memref<64x1xf32, #tpu.memory_space<vmem>>, %arg8: memref<1x1xf32, #tpu.memory_space<vmem>>, %arg9: memref<1x1xf32, #tpu.memory_space<vmem>>, %arg10: memref<1x1xf32, #tpu.memory_space<vmem>>, %arg11: memref<1x1xf32, #tpu.memory_space<vmem>>, %arg12: memref<1x32xf32, #tpu.memory_space<vmem>>) attributes {dimension_semantics = [#tpu.dimension_semantics<arbitrary>], iteration_bounds = array<i64: 1>, scalar_prefetch = 0 : i64, scratch_operands = 3 : i64, tpu.core_type = #tpu.core_type<tc>, window_params = [{transform_indices = @transform_0, window_bounds = array<i64: 1, 8, 32>}, {pipeline_mode = #tpu.pipeline_mode<synchronous>, transform_indices = @transform_1, window_bounds = array<i64: 32, 1>}, {pipeline_mode = #tpu.pipeline_mode<synchronous>, transform_indices = @transform_2, window_bounds = array<i64: 32, 64>}, {pipeline_mode = #tpu.pipeline_mode<synchronous>, transform_indices = @transform_3, window_bounds = array<i64: 1, 64>}, {pipeline_mode = #tpu.pipeline_mode<synchronous>, transform_indices = @transform_4, window_bounds = array<i64: 64, 64>}, {pipeline_mode = #tpu.pipeline_mode<synchronous>, transform_indices = @transform_5, window_bounds = array<i64: 1, 64>}, {pipeline_mode = #tpu.pipeline_mode<synchronous>, transform_indices = @transform_6, window_bounds = array<i64: 64, 1>}, {pipeline_mode = #tpu.pipeline_mode<synchronous>, transform_indices = @transform_7, window_bounds = array<i64: 1, 1>}, {pipeline_mode = #tpu.pipeline_mode<synchronous>, transform_indices = @transform_8, window_bounds = array<i64: 1, 1>}]} {
    %c0_i32 = arith.constant 0 : i32
    %0 = arith.cmpi eq, %arg0, %c0_i32 : i32
    %1 = arith.extui %0 : i1 to i32
    %c0_i32_0 = arith.constant 0 : i32
    %2 = arith.cmpi ne, %1, %c0_i32_0 : i32
    scf.if %2 {
      %cst_22 = arith.constant 0xFF800000 : f32
      %32 = vector.broadcast %cst_22 : f32 to vector<1x1xf32>
      %c0_23 = arith.constant 0 : index
      %c0_24 = arith.constant 0 : index
      %33 = vector.load %arg10[%c0_23, %c0_24] : memref<1x1xf32, #tpu.memory_space<vmem>>, vector<1x1xf32>
      tpu.vector_store %arg10[%c0_23, %c0_24], %32 {strides = array<i32>} : memref<1x1xf32, #tpu.memory_space<vmem>>, vector<1x1xf32>,
      %cst_25 = arith.constant 0.000000e+00 : f32
      %34 = vector.broadcast %cst_25 : f32 to vector<1x1xf32>
      %c0_26 = arith.constant 0 : index
      %c0_27 = arith.constant 0 : index
      %35 = vector.load %arg11[%c0_26, %c0_27] : memref<1x1xf32, #tpu.memory_space<vmem>>, vector<1x1xf32>
      tpu.vector_store %arg11[%c0_26, %c0_27], %34 {strides = array<i32>} : memref<1x1xf32, #tpu.memory_space<vmem>>, vector<1x1xf32>,
      %cst_28 = arith.constant 0.000000e+00 : f32
      %36 = vector.broadcast %cst_28 : f32 to vector<1x32xf32>
      %c0_29 = arith.constant 0 : index
      %c0_30 = arith.constant 0 : index
      %37 = vector.load %arg12[%c0_29, %c0_30] : memref<1x32xf32, #tpu.memory_space<vmem>>, vector<1x32xf32>
      tpu.vector_store %arg12[%c0_29, %c0_30], %36 {strides = array<i32>} : memref<1x32xf32, #tpu.memory_space<vmem>>, vector<1x32xf32>,
    } else {
    }
    %c0 = arith.constant 0 : index
    %c0_1 = arith.constant 0 : index
    %c0_2 = arith.constant 0 : index
    %3 = vector.load %arg1[%c0, %c0_1, %c0_2] : memref<1x8x32xf32, #tpu.memory_space<vmem>>, vector<1x8x32xf32>
    %c0_3 = arith.constant 0 : index
    %c0_4 = arith.constant 0 : index
    %4 = vector.load %arg2[%c0_3, %c0_4] : memref<32x1xf32, #tpu.memory_space<vmem>>, vector<32x1xf32>
    %5 = vector.shape_cast %3 : vector<1x8x32xf32> to vector<8x32xf32>
    %cst = arith.constant dense<0.000000e+00> : vector<8x1xf32>
    %6 = tpu.matmul %5, %4, %cst {dimension_numbers = #tpu.dot_dimension_numbers<[1], [0], [0], [1], [0, 0, 1, 1], [], []>} : vector<8x32xf32>, vector<32x1xf32>, vector<8x1xf32> -> vector<8x1xf32>
    %c0_5 = arith.constant 0 : index
    %c0_6 = arith.constant 0 : index
    %7 = vector.load %arg10[%c0_5, %c0_6] : memref<1x1xf32, #tpu.memory_space<vmem>>, vector<1x1xf32>
    %cst_7 = arith.constant dense<0xFF800000> : vector<1xf32>
    %8 = vector.multi_reduction <maximumf>, %6, %cst_7 [0] : vector<8x1xf32> to vector<1xf32>
    %9 = vector.shape_cast %8 : vector<1xf32> to vector<1x1xf32>
    %10 = arith.maximumf %7, %9 : vector<1x1xf32>
    %11 = arith.subf %7, %10 : vector<1x1xf32>
    %12 = math.exp %11 : vector<1x1xf32>
    %13 = vector.broadcast %10 : vector<1x1xf32> to vector<8x1xf32>
    %14 = arith.subf %6, %13 : vector<8x1xf32>
    %15 = math.exp %14 : vector<8x1xf32>
    %c0_8 = arith.constant 0 : index
    %c0_9 = arith.constant 0 : index
    %16 = vector.load %arg11[%c0_8, %c0_9] : memref<1x1xf32, #tpu.memory_space<vmem>>, vector<1x1xf32>
    %17 = arith.mulf %12, %16 : vector<1x1xf32>
    %cst_10 = arith.constant dense<0.000000e+00> : vector<1xf32>
    %18 = vector.multi_reduction <add>, %15, %cst_10 [0] : vector<8x1xf32> to vector<1xf32>
    %19 = vector.shape_cast %18 : vector<1xf32> to vector<1x1xf32>
    %20 = arith.addf %17, %19 : vector<1x1xf32>
    %c0_11 = arith.constant 0 : index
    %c0_12 = arith.constant 0 : index
    %21 = vector.load %arg11[%c0_11, %c0_12] : memref<1x1xf32, #tpu.memory_space<vmem>>, vector<1x1xf32>
    tpu.vector_store %arg11[%c0_11, %c0_12], %20 {strides = array<i32>} : memref<1x1xf32, #tpu.memory_space<vmem>>, vector<1x1xf32>,
    %cst_13 = arith.constant dense<0.000000e+00> : vector<1x32xf32>
    %22 = tpu.matmul %15, %5, %cst_13 {dimension_numbers = #tpu.dot_dimension_numbers<[0], [0], [1], [1], [0, 1, 1, 1], [], []>} : vector<8x1xf32>, vector<8x32xf32>, vector<1x32xf32> -> vector<1x32xf32>
    %c0_14 = arith.constant 0 : index
    %c0_15 = arith.constant 0 : index
    %23 = vector.load %arg12[%c0_14, %c0_15] : memref<1x32xf32, #tpu.memory_space<vmem>>, vector<1x32xf32>
    %24 = vector.broadcast %12 : vector<1x1xf32> to vector<1x32xf32>
    %25 = arith.mulf %24, %23 : vector<1x32xf32>
    %26 = arith.addf %25, %22 : vector<1x32xf32>
    %c0_16 = arith.constant 0 : index
    %c0_17 = arith.constant 0 : index
    %27 = vector.load %arg12[%c0_16, %c0_17] : memref<1x32xf32, #tpu.memory_space<vmem>>, vector<1x32xf32>
    tpu.vector_store %arg12[%c0_16, %c0_17], %26 {strides = array<i32>} : memref<1x32xf32, #tpu.memory_space<vmem>>, vector<1x32xf32>,
    %c0_18 = arith.constant 0 : index
    %c0_19 = arith.constant 0 : index
    %28 = vector.load %arg10[%c0_18, %c0_19] : memref<1x1xf32, #tpu.memory_space<vmem>>, vector<1x1xf32>
    tpu.vector_store %arg10[%c0_18, %c0_19], %10 {strides = array<i32>} : memref<1x1xf32, #tpu.memory_space<vmem>>, vector<1x1xf32>,
    %c0_i32_20 = arith.constant 0 : i32
    %29 = arith.cmpi eq, %arg0, %c0_i32_20 : i32
    %30 = arith.extui %29 : i1 to i32
    %c0_i32_21 = arith.constant 0 : i32
    %31 = arith.cmpi ne, %30, %c0_i32_21 : i32
    scf.if %31 {
      %c0_22 = arith.constant 0 : index
      %c0_23 = arith.constant 0 : index
      %32 = vector.load %arg12[%c0_22, %c0_23] : memref<1x32xf32, #tpu.memory_space<vmem>>, vector<1x32xf32>
      %c0_24 = arith.constant 0 : index
      %c0_25 = arith.constant 0 : index
      %33 = vector.load %arg11[%c0_24, %c0_25] : memref<1x1xf32, #tpu.memory_space<vmem>>, vector<1x1xf32>
      %34 = tpu.reciprocal %33 {approx = true} : vector<1x1xf32> -> vector<1x1xf32>
      %35 = vector.broadcast %34 : vector<1x1xf32> to vector<1x32xf32>
      %36 = arith.mulf %32, %35 : vector<1x32xf32>
      %c0_26 = arith.constant 0 : index
      %c0_27 = arith.constant 0 : index
      %37 = vector.load %arg3[%c0_26, %c0_27] : memref<32x64xf32, #tpu.memory_space<vmem>>, vector<32x64xf32>
      %cst_28 = arith.constant dense<0.000000e+00> : vector<1x64xf32>
      %38 = tpu.matmul %36, %37, %cst_28 {dimension_numbers = #tpu.dot_dimension_numbers<[1], [0], [0], [1], [0, 0, 1, 1], [], []>} : vector<1x32xf32>, vector<32x64xf32>, vector<1x64xf32> -> vector<1x64xf32>
      %c0_29 = arith.constant 0 : index
      %c0_30 = arith.constant 0 : index
      %39 = vector.load %arg4[%c0_29, %c0_30] : memref<1x64xf32, #tpu.memory_space<vmem>>, vector<1x64xf32>
      %40 = arith.addf %38, %39 : vector<1x64xf32>
      %cst_31 = arith.constant 0.000000e+00 : f32
      %41 = vector.broadcast %cst_31 : f32 to vector<1x64xf32>
      %42 = arith.maximumf %40, %41 : vector<1x64xf32>
      %c0_32 = arith.constant 0 : index
      %c0_33 = arith.constant 0 : index
      %43 = vector.load %arg5[%c0_32, %c0_33] : memref<64x64xf32, #tpu.memory_space<vmem>>, vector<64x64xf32>
      %cst_34 = arith.constant dense<0.000000e+00> : vector<1x64xf32>
      %44 = tpu.matmul %42, %43, %cst_34 {dimension_numbers = #tpu.dot_dimension_numbers<[1], [0], [0], [1], [0, 0, 1, 1], [], []>} : vector<1x64xf32>, vector<64x64xf32>, vector<1x64xf32> -> vector<1x64xf32>
      %c0_35 = arith.constant 0 : index
      %c0_36 = arith.constant 0 : index
      %45 = vector.load %arg6[%c0_35, %c0_36] : memref<1x64xf32, #tpu.memory_space<vmem>>, vector<1x64xf32>
      %46 = arith.addf %44, %45 : vector<1x64xf32>
      %cst_37 = arith.constant 0.000000e+00 : f32
      %47 = vector.broadcast %cst_37 : f32 to vector<1x64xf32>
      %48 = arith.maximumf %46, %47 : vector<1x64xf32>
      %c0_38 = arith.constant 0 : index
      %c0_39 = arith.constant 0 : index
      %49 = vector.load %arg7[%c0_38, %c0_39] : memref<64x1xf32, #tpu.memory_space<vmem>>, vector<64x1xf32>
      %cst_40 = arith.constant dense<0.000000e+00> : vector<1x1xf32>
      %50 = tpu.matmul %48, %49, %cst_40 {dimension_numbers = #tpu.dot_dimension_numbers<[1], [0], [0], [1], [0, 0, 1, 1], [], []>} : vector<1x64xf32>, vector<64x1xf32>, vector<1x1xf32> -> vector<1x1xf32>
      %c0_41 = arith.constant 0 : index
      %c0_42 = arith.constant 0 : index
      %51 = vector.load %arg8[%c0_41, %c0_42] : memref<1x1xf32, #tpu.memory_space<vmem>>, vector<1x1xf32>
      %52 = arith.addf %50, %51 : vector<1x1xf32>
      %c0_43 = arith.constant 0 : index
      %c0_44 = arith.constant 0 : index
      %53 = vector.load %arg9[%c0_43, %c0_44] : memref<1x1xf32, #tpu.memory_space<vmem>>, vector<1x1xf32>
      tpu.vector_store %arg9[%c0_43, %c0_44], %52 {strides = array<i32>} : memref<1x1xf32, #tpu.memory_space<vmem>>, vector<1x1xf32>,
    } else {
    }
    return
  }
  func.func @transform_0(%arg0: i32) -> (i32, i32, i32) {
    %c0_i32 = arith.constant 0 : i32
    %c0_i32_0 = arith.constant 0 : i32
    %c0_i32_1 = arith.constant 0 : i32
    return %c0_i32, %arg0, %c0_i32_0 : i32, i32, i32
  }
  func.func @transform_1(%arg0: i32) -> (i32, i32) {
    %c0_i32 = arith.constant 0 : i32
    %c0_i32_0 = arith.constant 0 : i32
    %c0_i32_1 = arith.constant 0 : i32
    return %c0_i32, %c0_i32_0 : i32, i32
  }
  func.func @transform_2(%arg0: i32) -> (i32, i32) {
    %c0_i32 = arith.constant 0 : i32
    %c0_i32_0 = arith.constant 0 : i32
    %c0_i32_1 = arith.constant 0 : i32
    return %c0_i32, %c0_i32_0 : i32, i32
  }
  func.func @transform_3(%arg0: i32) -> (i32, i32) {
    %c0_i32 = arith.constant 0 : i32
    %c0_i32_0 = arith.constant 0 : i32
    %c0_i32_1 = arith.constant 0 : i32
    return %c0_i32, %c0_i32_0 : i32, i32
  }
  func.func @transform_4(%arg0: i32) -> (i32, i32) {
    %c0_i32 = arith.constant 0 : i32
    %c0_i32_0 = arith.constant 0 : i32
    %c0_i32_1 = arith.constant 0 : i32
    return %c0_i32, %c0_i32_0 : i32, i32
  }
  func.func @transform_5(%arg0: i32) -> (i32, i32) {
    %c0_i32 = arith.constant 0 : i32
    %c0_i32_0 = arith.constant 0 : i32
    %c0_i32_1 = arith.constant 0 : i32
    return %c0_i32, %c0_i32_0 : i32, i32
  }
  func.func @transform_6(%arg0: i32) -> (i32, i32) {
    %c0_i32 = arith.constant 0 : i32
    %c0_i32_0 = arith.constant 0 : i32
    %c0_i32_1 = arith.constant 0 : i32
    return %c0_i32, %c0_i32_0 : i32, i32
  }
  func.func @transform_7(%arg0: i32) -> (i32, i32) {
    %c0_i32 = arith.constant 0 : i32
    %c0_i32_0 = arith.constant 0 : i32
    %c0_i32_1 = arith.constant 0 : i32
    return %c0_i32, %c0_i32_0 : i32, i32
  }
  func.func @transform_8(%arg0: i32) -> (i32, i32) {
    %c0_i32 = arith.constant 0 : i32
    %c0_i32_0 = arith.constant 0 : i32
    %c0_i32_1 = arith.constant 0 : i32
    return %c0_i32, %c0_i32_0 : i32, i32
  }
}

</mosaic_0001>

<llo_original>
// kernel: tpu_custom_call.1
$region0: #{tpu_custom_call.1}
  #allocation0 [shape = 'u32[]', space=smem, size = 0x4, offset = 0x4, fixed_abs, tag = 'smem constant byte address 0x4 - core index']
  #allocation1 [shape = 'u32[72,128]{1,0:T(1,128)}', space=vmem, size = 0x9000, scoped, tag = 'internal scratch']
  #allocation2 [shape = 'f32[1,1]{1,0:T(1,128)}', space=vmem, size = 0x200, scoped, tag = 'scratch operand']
  #allocation3 [shape = 'f32[1,1]{1,0:T(1,128)}', space=vmem, size = 0x200, scoped, tag = 'scratch operand']
  #allocation4 [shape = 'f32[1,32]{1,0:T(1,128)}', space=vmem, size = 0x200, scoped, tag = 'scratch operand']
  #allocation5 [shape = 'f32[1,1]{1,0:T(1,128)S(1)}', space=vmem, size = 0x200, scoped, tag = 'scoped memory for tpu_custom_call.1']
  %s0 = inlined_call_operand.hbm [shape: f32[1,8,32], index: 0, kind: input, shape index: {}]
  %s1 = inlined_call_operand.vmem [shape: f32[32,1], index: 1, kind: input, shape index: {}]
  %s2 = inlined_call_operand.vmem [shape: f32[32,64], index: 2, kind: input, shape index: {}]
  %s3 = inlined_call_operand.vmem [shape: f32[1,64], index: 3, kind: input, shape index: {}]
  %s4 = inlined_call_operand.vmem [shape: f32[64,64], index: 4, kind: input, shape index: {}]
  %s5 = inlined_call_operand.vmem [shape: f32[1,64], index: 5, kind: input, shape index: {}]
  %s6 = inlined_call_operand.vmem [shape: f32[64,1], index: 6, kind: input, shape index: {}]
  %s7 = inlined_call_operand.<no memory space> [shape: f32[1,1], index: 7, kind: input, shape index: {}]
  %s8 = inlined_call_operand.hbm [shape: f32[1,1], index: 8, kind: output, shape index: {}]
  %s9 = sld [smem:[#allocation0]]
  $region54: #{tpu_custom_call.1} parent=0
    _
  %s11 = ssub.s32 1, %s9
  %s12 = scalar_select 0, %s11, %s9
  %v13 = vstv %s7
  %14 = vst [vmem:[#allocation5] sm:$0x1] %v13
  $region1: #{tpu_custom_call.1} parent=0
    #allocation6 [shape = 'u8[4096]{0}', space=vmem, size = 0x1000, scoped, tag = 'input window, operand 0, single buffered']
    #allocation7 [shape = 's32[1]{0}', space=sflag, size = 0x4, scoped, tag = 'scoped memory for tpu_custom_call.1']
    #allocation8 [shape = 's32[1]{0}', space=sflag, size = 0x4, scoped, tag = 'scoped memory for tpu_custom_call.1']
    #allocation9 [shape = 'u8[512]{0}', space=vmem, size = 0x400, scoped, tag = 'output window, operand 0, single buffered']
    %15 = vsyncpa [#allocation7], 0
    %16 = vsyncpa [#allocation8], 0
    // Predicated region
    $region2: #{tpu_custom_call.1} parent=1 // pred_check
      _
    $region3: #{tpu_custom_call.1} parent=1 // pred_check_branch
      %18 = sbr.rel (0) target = $region5
    $region4: #{tpu_custom_call.1} parent=1 // pred_region
      %20 = vsyncadd [#allocation7], 0
      %s22 = sshll.u32 %s0, 4
      %s23 = int_to_ptr.hbm [resolvable:$true] %s22
      %s24 = sshll.u32 [#allocation6], 4
      %s25 = int_to_ptr.vmem [resolvable:$true] %s24
      %27 = dma.hbm_to_vmem [thread:$0]  %s23, 128, %s25, [#allocation7]
    $region5: #{tpu_custom_call.1} parent=1 // pred_fallthru
      _
    // Predicated region
    $region6: #{tpu_custom_call.1} parent=1 // pred_check
      _
    $region7: #{tpu_custom_call.1} parent=1 // pred_check_branch
      %29 = sbr.rel (0) target = $region9
    $region8: #{tpu_custom_call.1} parent=1 // pred_region
      _
    $region9: #{tpu_custom_call.1} parent=1 // pred_fallthru
      _
    // Predicated region
    $region10: #{tpu_custom_call.1} parent=1 // pred_check
      _
    $region11: #{tpu_custom_call.1} parent=1 // pred_check_branch
      %31 = sbr.rel (0) target = $region13
    $region12: #{tpu_custom_call.1} parent=1 // pred_region
      _
    $region13: #{tpu_custom_call.1} parent=1 // pred_fallthru
      _
    // Predicated region
    $region14: #{tpu_custom_call.1} parent=1 // pred_check
      _
    $region15: #{tpu_custom_call.1} parent=1 // pred_check_branch
      %33 = sbr.rel (0) target = $region17
    $region16: #{tpu_custom_call.1} parent=1 // pred_region
      _
    $region17: #{tpu_custom_call.1} parent=1 // pred_fallthru
      _
    // Predicated region
    $region18: #{tpu_custom_call.1} parent=1 // pred_check
      _
    $region19: #{tpu_custom_call.1} parent=1 // pred_check_branch
      %35 = sbr.rel (0) target = $region21
    $region20: #{tpu_custom_call.1} parent=1 // pred_region
      _
    $region21: #{tpu_custom_call.1} parent=1 // pred_fallthru
      _
    // Predicated region
    $region22: #{tpu_custom_call.1} parent=1 // pred_check
      _
    $region23: #{tpu_custom_call.1} parent=1 // pred_check_branch
      %37 = sbr.rel (0) target = $region25
    $region24: #{tpu_custom_call.1} parent=1 // pred_region
      _
    $region25: #{tpu_custom_call.1} parent=1 // pred_fallthru
      _
    // Predicated region
    $region26: #{tpu_custom_call.1} parent=1 // pred_check
      _
    $region27: #{tpu_custom_call.1} parent=1 // pred_check_branch
      %39 = sbr.rel (0) target = $region29
    $region28: #{tpu_custom_call.1} parent=1 // pred_region
      _
    $region29: #{tpu_custom_call.1} parent=1 // pred_fallthru
      _
    // Predicated region
    $region30: #{tpu_custom_call.1} parent=1 // pred_check
      _
    $region31: #{tpu_custom_call.1} parent=1 // pred_check_branch
      %41 = sbr.rel (0) target = $region33
    $region32: #{tpu_custom_call.1} parent=1 // pred_region
      _
    $region33: #{tpu_custom_call.1} parent=1 // pred_fallthru
      _
    // Predicated region
    $region34: #{tpu_custom_call.1} parent=1 // pred_check
      _
    $region35: #{tpu_custom_call.1} parent=1 // pred_check_branch
      %43 = sbr.rel (0) target = $region37
    $region36: #{tpu_custom_call.1} parent=1 // pred_region
      %45 = dma.done [#allocation7], 128
    $region37: #{tpu_custom_call.1} parent=1 // pred_fallthru
      _
    %p46 = scmp.eq.s32.totalorder 0, 0
    // Predicated region
    $region38: #{tpu_custom_call.1} parent=1 // pred_check
      %p47 = pneg %p46
    $region39: #{tpu_custom_call.1} parent=1 // pred_check_branch
      %49 = sbr.rel (%p47) target = $region41
    $region40: #{tpu_custom_call.1} parent=1 // pred_region
      %vm50 = vcmask 0
      %51 = vst.msk [vmem:[#allocation2] sm:$0x1] %vm50, -inf
      %52 = vst.msk [vmem:[#allocation3] sm:$0x1] %vm50, 0.0
      %vm53 = vcmask 253952
      %54 = vst.msk [vmem:[#allocation4] sm:$0x1] %vm53, 0.0
    $region41: #{tpu_custom_call.1} parent=1 // pred_fallthru
      _
    %v55 = vld [vmem:[#allocation6] sm:$0xff]
    %v56 = vld [vmem:[%s1] sm:$0xff]
    %v57 = vld [vmem:[%s1 + $0x8] sm:$0xff]
    %v58 = vld [vmem:[%s1 + $0x10] sm:$0xff]
    %v59 = vld [vmem:[%s1 + $0x18] sm:$0xff]
    %vm60 = vcmask 261120
    %v62 = vsel %vm60, %v55, 0
    %64 = vmatpush.msra.mxu0 0.0
    %65 = vmatpush.msra.mxu0 0.0
    %66 = vmatpush.msra.mxu0 0.0
    %67 = vmatpush.msra.mxu0 0.0
    %68 = vmatpush.msra.mxu0 0.0
    %69 = vmatpush.msra.mxu0 0.0
    %70 = vmatpush.msra.mxu0 0.0
    %71 = vmatpush.msra.mxu0 0.0
    %72 = vmatpush.msra.mxu0 0.0
    %73 = vmatpush.msra.mxu0 0.0
    %74 = vmatpush.msra.mxu0 0.0
    %75 = vmatpush.msra.mxu0 0.0
    %76 = vmatpush.msra.mxu0 %v59
    %77 = vmatpush.msra.mxu0 %v58
    %78 = vmatpush.msra.mxu0 %v57
    %79 = vmatpush.msra.mxu0 %v56
    %80 = vmatmul.f32.gmra.mxu0 %v62
    %v81 = vpop.f32.mrf.mxu0
    %v82 = vadd.f32 0.0, %v81
    %83 = vdwg.mxu0
    %v84 = vld [vmem:[#allocation2] sm:$0x1]
    %vm85 = vcmask 7168
    %v86 = vsel %vm85, %v82, -inf
    %v87 = vrot.slane %v86, 4
    %v88 = vmax.f32 %v86, %v87
    %v89 = vrot.slane %v88, 2
    %v90 = vmax.f32 %v88, %v89
    %v91 = vrot.slane %v90, 1
    %v92 = vmax.f32 %v90, %v91
    %v93 = vmax.f32 %v84, %v92
    %v94 = vsub.f32 %v84, %v93
    %v95 = vmul.f32 %v94, 1.442695
    %v96 = vpow.pop %v95
    %v98 = vperm.slane %v93, 0
    %v100 = vsub.f32 %v82, %v98
    %v101 = vmul.f32 %v100, 1.442695
    %v102 = vpow.pop %v101
    %v103 = vld [vmem:[#allocation3] sm:$0x1]
    %v104 = vmul.f32 %v96, %v103
    %v105 = vsel %vm85, %v102, 0.0
    %v106 = vrot.slane %v105, 4
    %v107 = vadd.f32 %v105, %v106
    %v108 = vrot.slane %v107, 2
    %v109 = vadd.f32 %v107, %v108
    %v110 = vrot.slane %v109, 1
    %v111 = vadd.f32 %v109, %v110
    %v112 = vadd.f32 %v104, %v111
    %vm113 = vcmask 0
    %114 = vst.msk [vmem:[#allocation3] sm:$0x1] %vm113, %v112
    %115 = vxpose.xlu0.b32.start [1/16] %v102, 128
    %116 = vxpose.xlu0.b32.cont [2/16] 0.0, 128
    %117 = vxpose.xlu0.b32.cont [3/16] 0.0, 128
    %118 = vxpose.xlu0.b32.cont [4/16] 0.0, 128
    %119 = vxpose.xlu0.b32.cont [5/16] 0.0, 128
    %120 = vxpose.xlu0.b32.cont [6/16] 0.0, 128
    %121 = vxpose.xlu0.b32.cont [7/16] 0.0, 128
    %122 = vxpose.xlu0.b32.cont [8/16] 0.0, 128
    %123 = vxpose.xlu0.b32.cont [9/16] 0.0, 128
    %124 = vxpose.xlu0.b32.cont [10/16] 0.0, 128
    %125 = vxpose.xlu0.b32.cont [11/16] 0.0, 128
    %126 = vxpose.xlu0.b32.cont [12/16] 0.0, 128
    %127 = vxpose.xlu0.b32.cont [13/16] 0.0, 128
    %128 = vxpose.xlu0.b32.cont [14/16] 0.0, 128
    %129 = vxpose.xlu0.b32.cont [15/16] 0.0, 128
    %130 = vxpose.xlu0.b32.end [16/16] 0.0, 128
    %v131 = vpop.trf.xlu0
    %v132 = vpop.trf.xlu0
    %v133 = vpop.trf.xlu0
    %v134 = vpop.trf.xlu0
    %v135 = vpop.trf.xlu0
    %v136 = vpop.trf.xlu0
    %v137 = vpop.trf.xlu0
    %v138 = vpop.trf.xlu0
    %v139 = vpop.trf.xlu0
    %v140 = vpop.trf.xlu0
    %v141 = vpop.trf.xlu0
    %v142 = vpop.trf.xlu0
    %v143 = vpop.trf.xlu0
    %v144 = vpop.trf.xlu0
    %v145 = vpop.trf.xlu0
    %v146 = vpop.trf.xlu0
    %vm147 = vcmask 64512
    %v149 = vsel %vm147, %v131, 0
    %151 = vmatpush.msra.mxu0 0.0
    %152 = vmatpush.msra.mxu0 0.0
    %153 = vmatpush.msra.mxu0 0.0
    %154 = vmatpush.msra.mxu0 0.0
    %155 = vmatpush.msra.mxu0 0.0
    %156 = vmatpush.msra.mxu0 0.0
    %157 = vmatpush.msra.mxu0 0.0
    %158 = vmatpush.msra.mxu0 0.0
    %159 = vmatpush.msra.mxu0 0.0
    %160 = vmatpush.msra.mxu0 0.0
    %161 = vmatpush.msra.mxu0 0.0
    %162 = vmatpush.msra.mxu0 0.0
    %163 = vmatpush.msra.mxu0 0.0
    %164 = vmatpush.msra.mxu0 0.0
    %165 = vmatpush.msra.mxu0 0.0
    %166 = vmatpush.msra.mxu0 %v55
    %167 = vmatmul.f32.gmra.mxu0 %v149
    %v168 = vpop.f32.mrf.mxu0
    %v169 = vadd.f32 0.0, %v168
    %170 = vdwg.mxu0
    %v171 = vld [vmem:[#allocation4] sm:$0x1]
    %173 = vset.pattern.permute.xlu0 0
    %174 = vperm.xlu0 %173, %v96
    %v175 = vpop.permute.xlu0 %174
    %v177 = vperm.slane %v175, 0
    %v178 = vmul.f32 %v177, %v171
    %v179 = vadd.f32 %v178, %v169
    %vm180 = vcmask 253952
    %181 = vst.msk [vmem:[#allocation4] sm:$0x1] %vm180, %v179
    %182 = vst.msk [vmem:[#allocation2] sm:$0x1] %vm113, %v93
    // Predicated region
    $region42: #{tpu_custom_call.1} parent=1 // pred_check
      %p183 = pneg %p46
    $region43: #{tpu_custom_call.1} parent=1 // pred_check_branch
      %185 = sbr.rel (%p183) target = $region45
    $region44: #{tpu_custom_call.1} parent=1 // pred_region
      %v186 = vld [vmem:[#allocation4] sm:$0x1]
      %v187 = vld [vmem:[#allocation3] sm:$0x1]
      %v188 = vrcp.pop %v187
      %190 = vset.pattern.permute.xlu0 0
      %191 = vperm.xlu0 %190, %v188
      %v192 = vpop.permute.xlu0 %191
      %v194 = vperm.slane %v192, 0
      %v195 = vmul.f32 %v186, %v194
      %v196 = vld [vmem:[%s2] sm:$0xff]
      %v197 = vld [vmem:[%s2 + $0x8] sm:$0xff]
      %v198 = vld [vmem:[%s2 + $0x10] sm:$0xff]
      %v199 = vld [vmem:[%s2 + $0x18] sm:$0xff]
      %v200 = vld [vmem:[%s3] sm:$0x1]
      %v202 = vsel %vm60, %v195, 0
      %204 = vmatpush.msra.mxu0 0.0
      %205 = vmatpush.msra.mxu0 0.0
      %206 = vmatpush.msra.mxu0 0.0
      %207 = vmatpush.msra.mxu0 0.0
      %208 = vmatpush.msra.mxu0 0.0
      %209 = vmatpush.msra.mxu0 0.0
      %210 = vmatpush.msra.mxu0 0.0
      %211 = vmatpush.msra.mxu0 0.0
      %212 = vmatpush.msra.mxu0 0.0
      %213 = vmatpush.msra.mxu0 0.0
      %214 = vmatpush.msra.mxu0 0.0
      %215 = vmatpush.msra.mxu0 0.0
      %216 = vmatpush.msra.mxu0 %v199
      %217 = vmatpush.msra.mxu0 %v198
      %218 = vmatpush.msra.mxu0 %v197
      %219 = vmatpush.msra.mxu0 %v196
      %220 = vmatmul.f32.gmra.mxu0 %v202
      %v221 = vpop.f32.mrf.mxu0
      %v222 = vadd.f32 %v200, %v221
      %223 = vdwg.mxu0
      %v224 = vmax.f32 %v222, 0.0
      %v225 = vld [vmem:[%s4] sm:$0xff]
      %v226 = vld [vmem:[%s4 + $0x8] sm:$0xff]
      %v227 = vld [vmem:[%s4 + $0x10] sm:$0xff]
      %v228 = vld [vmem:[%s4 + $0x18] sm:$0xff]
      %v229 = vld [vmem:[%s4 + $0x20] sm:$0xff]
      %v230 = vld [vmem:[%s4 + $0x28] sm:$0xff]
      %v231 = vld [vmem:[%s4 + $0x30] sm:$0xff]
      %v232 = vld [vmem:[%s4 + $0x38] sm:$0xff]
      %v233 = vld [vmem:[%s5] sm:$0x1]
      %vm234 = vcmask 523264
      %v236 = vsel %vm234, %v224, 0
      %238 = vmatpush.msra.mxu0 0.0
      %239 = vmatpush.msra.mxu0 0.0
      %240 = vmatpush.msra.mxu0 0.0
      %241 = vmatpush.msra.mxu0 0.0
      %242 = vmatpush.msra.mxu0 0.0
      %243 = vmatpush.msra.mxu0 0.0
      %244 = vmatpush.msra.mxu0 0.0
      %245 = vmatpush.msra.mxu0 0.0
      %246 = vmatpush.msra.mxu0 %v232
      %247 = vmatpush.msra.mxu0 %v231
      %248 = vmatpush.msra.mxu0 %v230
      %249 = vmatpush.msra.mxu0 %v229
      %250 = vmatpush.msra.mxu0 %v228
      %251 = vmatpush.msra.mxu0 %v227
      %252 = vmatpush.msra.mxu0 %v226
      %253 = vmatpush.msra.mxu0 %v225
      %254 = vmatmul.f32.gmra.mxu0 %v236
      %v255 = vpop.f32.mrf.mxu0
      %v256 = vadd.f32 %v233, %v255
      %257 = vdwg.mxu0
      %v258 = vmax.f32 %v256, 0.0
      %v259 = vld [vmem:[%s6] sm:$0xff]
      %v260 = vld [vmem:[%s6 + $0x8] sm:$0xff]
      %v261 = vld [vmem:[%s6 + $0x10] sm:$0xff]
      %v262 = vld [vmem:[%s6 + $0x18] sm:$0xff]
      %v263 = vld [vmem:[%s6 + $0x20] sm:$0xff]
      %v264 = vld [vmem:[%s6 + $0x28] sm:$0xff]
      %v265 = vld [vmem:[%s6 + $0x30] sm:$0xff]
      %v266 = vld [vmem:[%s6 + $0x38] sm:$0xff]
      %v267 = vld [vmem:[#allocation5] sm:$0x1]
      %v269 = vsel %vm234, %v258, 0
      %271 = vmatpush.msra.mxu0 0.0
      %272 = vmatpush.msra.mxu0 0.0
      %273 = vmatpush.msra.mxu0 0.0
      %274 = vmatpush.msra.mxu0 0.0
      %275 = vmatpush.msra.mxu0 0.0
      %276 = vmatpush.msra.mxu0 0.0
      %277 = vmatpush.msra.mxu0 0.0
      %278 = vmatpush.msra.mxu0 0.0
      %279 = vmatpush.msra.mxu0 %v266
      %280 = vmatpush.msra.mxu0 %v265
      %281 = vmatpush.msra.mxu0 %v264
      %282 = vmatpush.msra.mxu0 %v263
      %283 = vmatpush.msra.mxu0 %v262
      %284 = vmatpush.msra.mxu0 %v261
      %285 = vmatpush.msra.mxu0 %v260
      %286 = vmatpush.msra.mxu0 %v259
      %287 = vmatmul.f32.gmra.mxu0 %v269
      %v288 = vpop.f32.mrf.mxu0
      %v289 = vadd.f32 %v267, %v288
      %290 = vdwg.mxu0
      %291 = vst.msk [vmem:[#allocation9] sm:$0x1] %vm113, %v289
    $region45: #{tpu_custom_call.1} parent=1 // pred_fallthru
      _
    // Predicated region
    $region46: #{tpu_custom_call.1} parent=1 // pred_check
      _
    $region47: #{tpu_custom_call.1} parent=1 // pred_check_branch
      %293 = sbr.rel (0) target = $region49
    $region48: #{tpu_custom_call.1} parent=1 // pred_region
      %295 = vsyncadd [#allocation8], 0
      %s297 = sshll.u32 [#allocation9], 4
      %s298 = int_to_ptr.vmem [resolvable:$true] %s297
      %s299 = sshll.u32 %s8, 4
      %s300 = int_to_ptr.hbm [resolvable:$true] %s299
      %302 = dma.vmem_to_hbm [thread:$0]  %s298, 16, %s300, [#allocation8]
    $region49: #{tpu_custom_call.1} parent=1 // pred_fallthru
      _
    // Predicated region
    $region50: #{tpu_custom_call.1} parent=1 // pred_check
      _
    $region51: #{tpu_custom_call.1} parent=1 // pred_check_branch
      %304 = sbr.rel (0) target = $region53
    $region52: #{tpu_custom_call.1} parent=1 // pred_region
      %306 = dma.done [#allocation8], 16
    $region53: #{tpu_custom_call.1} parent=1 // pred_fallthru
      _
    %307 = vsyncpa [#allocation7], 1
    %308 = vsyncpa [#allocation8], 1

</llo_original>
